<compile_context>
chip_gen: v5e
topology: v5e:2x2
jax: 0.10.0
libtpu: 0.0.40
codegen_flags: <defaults>
</compile_context>

<pallas_src>
import functools

import jax
import jax.numpy as jnp
from jax.experimental import pallas as pl
from jax.experimental.pallas import tpu as pltpu


# ---------------------------------------------------------------------------
# Generation-aware configuration (VMEM limit / tile sizes / megacore split).
# ---------------------------------------------------------------------------
def make_tpu_config():
    vmem_cap = 128 * 1024 * 1024
    try:
        info = pltpu.get_tpu_info()
        vmem_cap = int(getattr(info, "vmem_capacity_bytes", vmem_cap))
    except Exception:
        pass
    if vmem_cap <= 64 * 1024 * 1024:
        # v7x-class: 64 MiB VMEM per TensorCore, 2 TCs per chip -> split batch
        # across the cores, keep blocks / scoped limit smaller.
        return {"vmem_limit": 40 * 1024 * 1024, "max_m": 512, "max_n": 1024,
                "t_chunk": 8, "core_splits": 2}
    # v5e / v6e: 128 MiB VMEM, single TensorCore -> big blocks, no batch split,
    # larger classifier tiles to cut weight re-streaming.
    return {"vmem_limit": 64 * 1024 * 1024, "max_m": 1024, "max_n": 1024,
            "t_chunk": 8, "core_splits": 1}


def _round_up(x, m):
    return ((x + m - 1) // m) * m


def _largest_divisor_le(n, cap):
    cap = max(1, min(n, cap))
    for t in range(cap, 0, -1):
        if n % t == 0:
            return t
    return 1


def _largest_lane_tile(n, cap):
    """Largest divisor of n that is a multiple of 128 and <= cap, else n (full)."""
    if n <= cap:
        return n
    t = (cap // 128) * 128
    while t >= 128:
        if n % t == 0:
            return t
        t -= 128
    # TODO(synk): no 128-multiple divisor -> full dim (only hit for odd vocab sizes).
    return n


def _pick_batch_block(batch, cfg):
    s = cfg["core_splits"]
    if s >= 2 and batch % (16 * s) == 0:      # keep bf16-native 16-sublane blocks
        return batch // s
    return batch


# ---------------------------------------------------------------------------
# Fused linear kernel: out = sum_i x_i @ w_i + b   (bf16 operands, f32 accum).
# Used for the hoisted LSTM input projections (1 or 2 operand pairs -> no
# concat of (x, attn)), the attention q/k projections and the classifier.
# ---------------------------------------------------------------------------
def _linear_sum_kernel(*refs):
    b_ref, o_ref = refs[-2], refs[-1]
    n_pairs = (len(refs) - 2) // 2
    acc = jnp.dot(refs[0][...], refs[1][...], preferred_element_type=jnp.float32)
    for i in range(1, n_pairs):
        acc = acc + jnp.dot(refs[2 * i][...], refs[2 * i + 1][...],
                            preferred_element_type=jnp.float32)
    o_ref[...] = (acc + b_ref[...]).astype(o_ref.dtype)


def linear_sum_pallas(pairs, bias_row, *, out_dtype, cfg):
    """pairs: list of (x2d (M,Ki) bf16, w_t (Ki,N) bf16); bias_row (1,N) f32."""
    M = pairs[0][0].shape[0]
    N = bias_row.shape[1]
    max_m, max_n = cfg["max_m"], cfg["max_n"]

    tm = _round_up(M, 8) if M <= max_m else max_m
    Mp = _round_up(M, tm)
    tn = _largest_lane_tile(N, max_n)

    operands, in_specs = [], []
    for (x2d, w_t) in pairs:
        K = x2d.shape[1]
        if Mp != M:
            x2d = jnp.pad(x2d, ((0, Mp - M), (0, 0)))
        operands.append(x2d)
        in_specs.append(pl.BlockSpec((tm, K), lambda i, j: (i, 0)))
        operands.append(w_t)
        in_specs.append(pl.BlockSpec((K, tn), lambda i, j: (0, j)))
    operands.append(bias_row)
    in_specs.append(pl.BlockSpec((1, tn), lambda i, j: (0, j)))

    out = pl.pallas_call(
        _linear_sum_kernel,
        out_shape=jax.ShapeDtypeStruct((Mp, N), out_dtype),
        grid_spec=pltpu.PrefetchScalarGridSpec(
            num_scalar_prefetch=0,
            grid=(Mp // tm, N // tn),
            in_specs=in_specs,
            out_specs=pl.BlockSpec((tm, tn), lambda i, j: (i, j)),
        ),
        compiler_params=pltpu.CompilerParams(
            dimension_semantics=("parallel", "parallel"),
            vmem_limit_bytes=cfg["vmem_limit"]),
    )(*operands)
    return out if Mp == M else out[:M]


# ---------------------------------------------------------------------------
# LSTM recurrent kernel.  Input projection already added (xg = x@Wih^T + bias,
# bf16).  h kept in a bf16 VMEM scratch (fed straight to the MXU), c in f32.
# Grid = (batch blocks [parallel], time chunks [arbitrary]); time loop inside.
# ---------------------------------------------------------------------------
def _lstm_recurrent_kernel(xg_ref, whh_ref, h0_ref, c0_ref,
                           out_ref, hn_ref, cn_ref, h_sc, c_sc, *, unroll):
    tc_idx = pl.program_id(1)

    @pl.when(tc_idx == 0)
    def _():
        h_sc[...] = h0_ref[0].astype(h_sc.dtype)
        c_sc[...] = c0_ref[0]

    H = c_sc.shape[-1]
    Tc = xg_ref.shape[0]
    whh = whh_ref[...]                                   # (H, 4H) bf16, resident

    def step(t, _):
        h = h_sc[...]                                    # bf16 (Bb, H)
        c = c_sc[...]                                    # f32  (Bb, H)
        gates = xg_ref[t].astype(jnp.float32) + jnp.dot(
            h, whh, preferred_element_type=jnp.float32)
        i_g = jax.nn.sigmoid(gates[:, 0 * H:1 * H])
        f_g = jax.nn.sigmoid(gates[:, 1 * H:2 * H])
        g_g = jnp.tanh(gates[:, 2 * H:3 * H])
        o_g = jax.nn.sigmoid(gates[:, 3 * H:4 * H])
        c_new = f_g * c + i_g * g_g
        h_new = (o_g * jnp.tanh(c_new)).astype(jnp.bfloat16)
        out_ref[t] = h_new
        h_sc[...] = h_new
        c_sc[...] = c_new
        return 0

    jax.lax.fori_loop(0, Tc, step, 0, unroll=unroll)

    @pl.when(tc_idx == pl.num_programs(1) - 1)
    def _():
        hn_ref[0] = h_sc[...].astype(hn_ref.dtype)
        cn_ref[0] = c_sc[...]


def lstm_layer(x_parts, h0, c0, lp, cfg):
    """x_parts: list of (T,B,Ii) inputs matching lp['wih_t_parts'].  Returns
    (out bf16 (T,B,H), (hn bf16 (1,B,H), cn f32 (1,B,H)))."""
    T, B = x_parts[0].shape[:2]
    H = lp["whh_t"].shape[0]

    # Phase A: hoisted input projection(s) over all T*B rows (no concat).
    xs2d = [xp.reshape(T * B, xp.shape[-1]).astype(jnp.bfloat16) for xp in x_parts]
    xg = linear_sum_pallas(list(zip(xs2d, lp["wih_t_parts"])), lp["bias"],
                           out_dtype=jnp.bfloat16, cfg=cfg).reshape(T, B, 4 * H)

    # Phase B: recurrent scan with the time loop inside the kernel.
    Tc = _largest_divisor_le(T, cfg["t_chunk"])
    Bb = _pick_batch_block(B, cfg)
    grid = (B // Bb, T // Tc)

    # Unroll decided by per-step live footprint (gates f32 + c f32 + h bf16).
    step_bytes = Bb * 4 * H * 4 + Bb * H * 4 + Bb * H * 2
    if step_bytes <= 64 * 1024:
        unroll = min(Tc, 8)
    elif step_bytes <= 256 * 1024:
        unroll = min(Tc, 2)
    else:
        unroll = 1

    kernel = functools.partial(_lstm_recurrent_kernel, unroll=unroll)
    out, hn, cn = pl.pallas_call(
        kernel,
        out_shape=(jax.ShapeDtypeStruct((T, B, H), jnp.bfloat16),
                   jax.ShapeDtypeStruct((1, B, H), jnp.bfloat16),
                   jax.ShapeDtypeStruct((1, B, H), jnp.float32)),
        grid_spec=pltpu.PrefetchScalarGridSpec(
            num_scalar_prefetch=0,
            grid=grid,
            in_specs=[
                pl.BlockSpec((Tc, Bb, 4 * H), lambda b, c: (c, b, 0)),
                pl.BlockSpec((H, 4 * H), lambda b, c: (0, 0)),
                pl.BlockSpec((1, Bb, H), lambda b, c: (0, b, 0)),
                pl.BlockSpec((1, Bb, H), lambda b, c: (0, b, 0)),
            ],
            out_specs=[
                pl.BlockSpec((Tc, Bb, H), lambda b, c: (c, b, 0)),
                pl.BlockSpec((1, Bb, H), lambda b, c: (0, b, 0)),
                pl.BlockSpec((1, Bb, H), lambda b, c: (0, b, 0)),
            ],
            scratch_shapes=[pltpu.VMEM((Bb, H), jnp.bfloat16),
                            pltpu.VMEM((Bb, H), jnp.float32)],
        ),
        compiler_params=pltpu.CompilerParams(
            dimension_semantics=("parallel", "arbitrary"),
            vmem_limit_bytes=cfg["vmem_limit"]),
    )(xg, lp["whh_t"], h0.astype(jnp.float32), c0.astype(jnp.float32))
    return out, (hn, cn)


# ---------------------------------------------------------------------------
# Normalized Bahdanau attention.  Projections are hoisted outside; this kernel
# does the batched score / mask / softmax / context for one batch block.
# ---------------------------------------------------------------------------
def _attn_kernel(aq_ref, ak_ref, k_ref, v_ref, ctx_ref, attn_ref, scores_ref,
                 s_sc, *, tq_chunk, tk_chunk):
    Bb, T_q, _ = aq_ref.shape
    T_kp = ak_ref.shape[1]
    v = v_ref[...]                                               # (1, U) f32

    # s[b,q,k] = sum_u v[u] * tanh(aq[b,q,u] + ak[b,k,u]); chunked into scratch
    # to bound the 4-D tanh intermediate (no lane-axis concat).
    for q0 in range(0, T_q, tq_chunk):
        tq = min(tq_chunk, T_q - q0)
        aq_c = aq_ref[:, q0:q0 + tq, :]                          # (Bb, tq, U)
        for k0 in range(0, T_kp, tk_chunk):
            tk = min(tk_chunk, T_kp - k0)
            ak_c = ak_ref[:, k0:k0 + tk, :]                      # (Bb, tk, U)
            t = jnp.tanh(aq_c[:, :, None, :] + ak_c[:, None, :, :])
            s_sc[:, q0:q0 + tq, k0:k0 + tk] = jnp.sum(t * v, axis=-1)

    # Batched masking + softmax over the whole batch block.
    ctx = ctx_ref[...].reshape(Bb, 1, 1)
    kidx = jax.lax.broadcasted_iota(jnp.int32, (Bb, T_q, T_kp), 2)
    s = jnp.where(kidx >= ctx, jnp.float32(-65504.0), s_sc[...])
    m = jnp.max(s, axis=-1, keepdims=True)
    e = jnp.exp(s - m)
    p = e * pl.reciprocal(jnp.sum(e, axis=-1, keepdims=True), approx=True)
    scores_ref[...] = p

    # Context vectors: batched bf16 MXU matmul.
    attn_ref[...] = jnp.einsum(
        "bqk,bkc->bqc", p.astype(jnp.bfloat16), k_ref[...],
        preferred_element_type=jnp.float32).astype(attn_ref.dtype)


def _attn_chunks(Bb, T_q, U, T_kp, budget=4 * 1024 * 1024):
    # TODO(synk): for very large Bb*U the chunks degrade to masked sub-128 lane
    # writes; at such sizes the batch block itself should be shrunk.
    per_qk = Bb * U * 4
    cells = max(1, budget // per_qk)
    tkc = min(T_kp, max(1, min(128, cells)))
    tqc = min(T_q, max(1, cells // tkc))
    return tqc, tkc


def bahdanau_attention(x_tbh, keys_tbc, context_len, ap, cfg):
    T_q, B, H = x_tbh.shape
    T_k, _, C = keys_tbc.shape
    U = ap["wq_t"].shape[1]

    # Hoisted projections (big time-major MXU matmuls; bias folded into keys).
    aq = linear_sum_pallas(
        [(x_tbh.reshape(T_q * B, H).astype(jnp.bfloat16), ap["wq_t"])],
        ap["zero_bias"], out_dtype=jnp.float32, cfg=cfg).reshape(T_q, B, U)
    ak = linear_sum_pallas(
        [(keys_tbc.reshape(T_k * B, C).astype(jnp.bfloat16), ap["wk_t"])],
        ap["nb"], out_dtype=jnp.float32, cfg=cfg).reshape(T_k, B, U)

    T_kp = _round_up(T_k, 128)                      # lane-dense score axis

    # Batch-major copies for the score/softmax/context kernel (keys in bf16).
    aq_b = jnp.transpose(aq, (1, 0, 2))
    ak_b = jnp.transpose(ak, (1, 0, 2))
    k_b = jnp.transpose(keys_tbc.astype(jnp.bfloat16), (1, 0, 2))
    if T_kp != T_k:
        ak_b = jnp.pad(ak_b, ((0, 0), (0, T_kp - T_k), (0, 0)))
        k_b = jnp.pad(k_b, ((0, 0), (0, T_kp - T_k), (0, 0)))
    ctx2d = context_len.astype(jnp.int32).reshape(B, 1)

    Bb = _pick_batch_block(B, cfg)
    tqc, tkc = _attn_chunks(Bb, T_q, U, T_kp)

    # TODO(synk): rows with context_len == 0 softmax to uniform over padded keys.
    kernel = functools.partial(_attn_kernel, tq_chunk=tqc, tk_chunk=tkc)
    attn_b, scores_b = pl.pallas_call(
        kernel,
        out_shape=(jax.ShapeDtypeStruct((B, T_q, C), jnp.bfloat16),
                   jax.ShapeDtypeStruct((B, T_q, T_kp), jnp.float32)),
        grid_spec=pltpu.PrefetchScalarGridSpec(
            num_scalar_prefetch=0,
            grid=(B // Bb,),
            in_specs=[
                pl.BlockSpec((Bb, T_q, U), lambda b: (b, 0, 0)),
                pl.BlockSpec((Bb, T_kp, U), lambda b: (b, 0, 0)),
                pl.BlockSpec((Bb, T_kp, C), lambda b: (b, 0, 0)),
                pl.BlockSpec((1, U), lambda b: (0, 0)),
                pl.BlockSpec((Bb, 1), lambda b: (b, 0)),
            ],
            out_specs=[
                pl.BlockSpec((Bb, T_q, C), lambda b: (b, 0, 0)),
                pl.BlockSpec((Bb, T_q, T_kp), lambda b: (b, 0, 0)),
            ],
            scratch_shapes=[pltpu.VMEM((Bb, T_q, T_kp), jnp.float32)],
        ),
        compiler_params=pltpu.CompilerParams(
            dimension_semantics=("parallel",),
            vmem_limit_bytes=cfg["vmem_limit"]),
    )(aq_b, ak_b, k_b, ap["v_row"], ctx2d)

    attn_tbc = jnp.transpose(attn_b, (1, 0, 2))                   # (T_q, B, C) bf16
    scores = jnp.transpose(scores_b[:, :, :T_k], (1, 0, 2))       # (T_q, B, T_k) f32
    return attn_tbc, scores


# ---------------------------------------------------------------------------
# Classifier (reuses the fused linear kernel).
# ---------------------------------------------------------------------------
def classifier_forward(x_tbh, prepared, cfg):
    T, B, H = x_tbh.shape
    V = prepared["classifier_wt"].shape[1]
    logits = linear_sum_pallas(
        [(x_tbh.reshape(T * B, H).astype(jnp.bfloat16), prepared["classifier_wt"])],
        prepared["classifier_b"], out_dtype=jnp.float32, cfg=cfg)
    return logits.reshape(T, B, V)


# ---------------------------------------------------------------------------
# Parameter preparation: transpose / cast / split all weights once.
# ---------------------------------------------------------------------------
def prepare_params(params, cfg):
    layers_p = []
    for lp in params["layers"]:
        w_ih = lp["w_ih"]                               # (4H, I)
        H4, I = w_ih.shape
        H = H4 // 4
        wih_t = jnp.transpose(w_ih).astype(jnp.bfloat16)        # (I, 4H)
        if I == H:
            parts = [wih_t]
        else:                                           # (x, attn) layer: split W_ih
            parts = [wih_t[:H], wih_t[H:]]
        layers_p.append({
            "wih_t_parts": parts,
            "whh_t": jnp.transpose(lp["w_hh"]).astype(jnp.bfloat16),
            "bias": (lp["b_ih"] + lp["b_hh"]).reshape(1, 4 * H).astype(jnp.float32),
        })

    ap = params["attn"]
    v = ap["linear_att"]
    v = v / jnp.sqrt(jnp.sum(v * v)) * ap["normalize_scalar"][0]
    U = v.shape[0]
    attn_p = {
        "wq_t": jnp.transpose(ap["wq"]).astype(jnp.bfloat16),
        "wk_t": jnp.transpose(ap["wk"]).astype(jnp.bfloat16),
        "nb": ap["normalize_bias"].reshape(1, U).astype(jnp.float32),
        "zero_bias": jnp.zeros((1, U), jnp.float32),
        "v_row": v.reshape(1, U).astype(jnp.float32),
    }

    V = params["classifier_w"].shape[0]
    return {
        "cfg": cfg,
        "embedding": params["embedding"],
        "layers": layers_p,
        "attn": attn_p,
        "classifier_wt": jnp.transpose(params["classifier_w"]).astype(jnp.bfloat16),
        "classifier_b": params["classifier_b"].reshape(1, V).astype(jnp.float32),
    }


# ---------------------------------------------------------------------------
# ResidualRecurrentDecoder.forward
# ---------------------------------------------------------------------------
def residual_recurrent_decoder_forward(tokens, context, prepared, inference=False):
    enc_context, enc_len, hidden = context
    cfg = prepared["cfg"]
    layers = prepared["layers"]
    num_layers = len(layers)
    T, B = tokens.shape
    H = prepared["embedding"].shape[1]

    if hidden is None:
        zeros = jnp.zeros((1, B, H), jnp.float32)
        hidden_states = [(zeros, zeros) for _ in range(num_layers)]
    else:
        hidden = hidden.astype(jnp.float32)
        hidden_states = [(hidden[2 * i:2 * i + 1], hidden[2 * i + 1:2 * i + 2])
                         for i in range(num_layers)]

    # TODO(synk): embedding lookup is an XLA gather (no dedicated Pallas kernel).
    x = prepared["embedding"][tokens]                      # (T, B, H)

    next_hidden = []

    # layer 0: attention LSTM (RecurrentAttention)
    h0, c0 = hidden_states[0]
    x, hc = lstm_layer([x], h0, c0, layers[0], cfg)
    next_hidden.append(hc)
    attn, scores = bahdanau_attention(x, enc_context, enc_len, prepared["attn"], cfg)

    # layer 1 (concat eliminated: split-W projection of x and attn)
    h0, c0 = hidden_states[1]
    x, hc = lstm_layer([x, attn], h0, c0, layers[1], cfg)
    next_hidden.append(hc)

    # layers 2..num_layers-1 with residual connections
    for i in range(2, num_layers):
        residual = x
        h0, c0 = hidden_states[i]
        x, hc = lstm_layer([x, attn], h0, c0, layers[i], cfg)
        next_hidden.append(hc)
        x = (x.astype(jnp.float32) + residual.astype(jnp.float32)).astype(jnp.bfloat16)

    logits = classifier_forward(x, prepared, cfg)

    if inference:
        packaged = jnp.concatenate(
            [a.astype(jnp.float32) for hc in next_hidden for a in hc], axis=0)
    else:
        packaged = None
    return logits, scores, [enc_context, enc_len, packaged]


# ---------------------------------------------------------------------------
# Pure-JAX reference for validation.
# ---------------------------------------------------------------------------
def _ref_lstm_layer(x, h0, c0, lp):
    H = h0.shape[-1]
    h, c = h0[0], c0[0]
    outs = []
    for t in range(x.shape[0]):
        gates = (x[t] @ lp["w_ih"].T + lp["b_ih"] + h @ lp["w_hh"].T + lp["b_hh"])
        i_g = jax.nn.sigmoid(gates[:, 0 * H:1 * H])
        f_g = jax.nn.sigmoid(gates[:, 1 * H:2 * H])
        g_g = jnp.tanh(gates[:, 2 * H:3 * H])
        o_g = jax.nn.sigmoid(gates[:, 3 * H:4 * H])
        c = f_g * c + i_g * g_g
        h = o_g * jnp.tanh(c)
        outs.append(h)
    return jnp.stack(outs, 0), h[None], c[None]


def _ref_attention(q_tbh, k_tbc, context_len, ap):
    q = jnp.transpose(q_tbh, (1, 0, 2))
    k = jnp.transpose(k_tbc, (1, 0, 2))
    att_q = q @ ap["wq"].T
    att_k = k @ ap["wk"].T
    v = ap["linear_att"]
    v = v / jnp.linalg.norm(v) * ap["normalize_scalar"][0]
    s = jnp.tanh(att_q[:, :, None, :] + att_k[:, None, :, :]
                 + ap["normalize_bias"]) @ v
    mask = jnp.arange(k_tbc.shape[0])[None, :] >= context_len[:, None]
    s = jnp.where(mask[:, None, :], -65504.0, s)
    p = jax.nn.softmax(s, axis=-1)
    attn = p @ k
    return jnp.transpose(attn, (1, 0, 2)), jnp.transpose(p, (1, 0, 2))


def _ref_decoder(tokens, context, params):
    enc_ctx, enc_len, hidden = context
    layers = params["layers"]
    nl = len(layers)
    x = params["embedding"][tokens]
    hs = [(hidden[2 * i:2 * i + 1], hidden[2 * i + 1:2 * i + 2]) for i in range(nl)]
    next_hidden = []

    x, hn, cn = _ref_lstm_layer(x, hs[0][0], hs[0][1], layers[0])
    next_hidden.append((hn, cn))
    attn, scores = _ref_attention(x, enc_ctx, enc_len, params["attn"])

    xin = jnp.concatenate([x, attn], 2)
    x, hn, cn = _ref_lstm_layer(xin, hs[1][0], hs[1][1], layers[1])
    next_hidden.append((hn, cn))

    for i in range(2, nl):
        residual = x
        xin = jnp.concatenate([x, attn], 2)
        x, hn, cn = _ref_lstm_layer(xin, hs[i][0], hs[i][1], layers[i])
        next_hidden.append((hn, cn))
        x = x + residual

    logits = x @ params["classifier_w"].T + params["classifier_b"]
    packaged = jnp.concatenate([a for hc in next_hidden for a in hc], 0)
    return logits, scores, packaged


if __name__ == "__main__":
    # Small shapes consistent with the module (hidden padded to 128 lanes,
    # batch at the bf16-native 16 sublanes).
    T, T_k, B = 8, 12, 16
    H = 128                       # hidden_size = context_size = num_units
    vocab = 256
    num_layers = 4
    init_w = 0.1

    key = jax.random.PRNGKey(0)
    keys = iter(jax.random.split(key, 64))

    def unif(shape):
        return jax.random.uniform(next(keys), shape, jnp.float32, -init_w, init_w)

    layers = []
    for li in range(num_layers):
        I = H if li == 0 else 2 * H
        layers.append({
            "w_ih": unif((4 * H, I)),
            "w_hh": unif((4 * H, H)),
            "b_ih": unif((4 * H,)),
            "b_hh": unif((4 * H,)),
        })

    params = {
        "embedding": unif((vocab, H)),
        "layers": layers,
        "attn": {
            "wq": unif((H, H)),
            "wk": unif((H, H)),
            "linear_att": unif((H,)),
            "normalize_bias": jnp.zeros((H,), jnp.float32),
            "normalize_scalar": jnp.full((1,), 1.0 / jnp.sqrt(H), jnp.float32),
        },
        "classifier_w": unif((vocab, H)),
        "classifier_b": unif((vocab,)),
    }

    tokens = jax.random.randint(next(keys), (T, B), 0, vocab, dtype=jnp.int32)
    enc_context = jax.random.normal(next(keys), (T_k, B, H), jnp.float32)
    enc_len = jnp.array([12, 7, 9, 3, 1, 12, 5, 8, 11, 2, 6, 10, 4, 12, 7, 1],
                        dtype=jnp.int32)
    hidden = 0.1 * jax.random.normal(next(keys), (2 * num_layers, B, H), jnp.float32)

    cfg = make_tpu_config()
    prepared = prepare_params(params, cfg)

    logits, scores, state = residual_recurrent_decoder_forward(
        tokens, (enc_context, enc_len, hidden), prepared, inference=True)
    jax.block_until_ready((logits, scores, state[2]))

    r_logits, r_scores, r_hidden = _ref_decoder(
        tokens, (enc_context, enc_len, hidden), params)

    assert jnp.allclose(logits, r_logits, atol=2e-2, rtol=2e-2), "logits mismatch"
    assert jnp.allclose(scores, r_scores, atol=2e-2, rtol=2e-2), "scores mismatch"
    assert jnp.allclose(state[2], r_hidden, atol=2e-2, rtol=2e-2), "hidden mismatch"

    print("KERNEL_OK")
</pallas_src>

<mosaic_0001>
module attributes {stable_mosaic.version = 11 : i64} {
  func.func @_linear_sum_kernel(%arg0: i32, %arg1: i32, %arg2: memref<128x128xbf16, #tpu.memory_space<vmem>>, %arg3: memref<128x512xbf16, #tpu.memory_space<vmem>>, %arg4: memref<1x512xf32, #tpu.memory_space<vmem>>, %arg5: memref<128x512xbf16, #tpu.memory_space<vmem>>) attributes {dimension_semantics = [#tpu.dimension_semantics<parallel>, #tpu.dimension_semantics<parallel>], iteration_bounds = array<i64: 1, 1>, scalar_prefetch = 0 : i64, scratch_operands = 0 : i64, tpu.core_type = #tpu.core_type<tc>, window_params = [{transform_indices = @transform_0, window_bounds = array<i64: 128, 128>}, {transform_indices = @transform_1, window_bounds = array<i64: 128, 512>}, {transform_indices = @transform_2, window_bounds = array<i64: 1, 512>}, {transform_indices = @transform_3, window_bounds = array<i64: 128, 512>}]} {
    %c0 = arith.constant 0 : index
    %c0_0 = arith.constant 0 : index
    %0 = vector.load %arg2[%c0, %c0_0] : memref<128x128xbf16, #tpu.memory_space<vmem>>, vector<128x128xbf16>
    %c0_1 = arith.constant 0 : index
    %c0_2 = arith.constant 0 : index
    %1 = vector.load %arg3[%c0_1, %c0_2] : memref<128x512xbf16, #tpu.memory_space<vmem>>, vector<128x512xbf16>
    %cst = arith.constant dense<0.000000e+00> : vector<128x512xf32>
    %2 = tpu.matmul %0, %1, %cst {dimension_numbers = #tpu.dot_dimension_numbers<[1], [0], [0], [1], [0, 0, 1, 1], [], []>} : vector<128x128xbf16>, vector<128x512xbf16>, vector<128x512xf32> -> vector<128x512xf32>
    %c0_3 = arith.constant 0 : index
    %c0_4 = arith.constant 0 : index
    %3 = vector.load %arg4[%c0_3, %c0_4] : memref<1x512xf32, #tpu.memory_space<vmem>>, vector<1x512xf32>
    %4 = vector.broadcast %3 : vector<1x512xf32> to vector<128x512xf32>
    %5 = arith.addf %2, %4 : vector<128x512xf32>
    %6 = arith.truncf %5 : vector<128x512xf32> to vector<128x512xbf16>
    %c0_5 = arith.constant 0 : index
    %c0_6 = arith.constant 0 : index
    %7 = vector.load %arg5[%c0_5, %c0_6] : memref<128x512xbf16, #tpu.memory_space<vmem>>, vector<128x512xbf16>
    tpu.vector_store %arg5[%c0_5, %c0_6], %6 {strides = array<i32>} : memref<128x512xbf16, #tpu.memory_space<vmem>>, vector<128x512xbf16>,
    return
  }
  func.func @transform_0(%arg0: i32, %arg1: i32) -> (i32, i32) {
    %c0_i32 = arith.constant 0 : i32
    %c0_i32_0 = arith.constant 0 : i32
    return %arg0, %c0_i32 : i32, i32
  }
  func.func @transform_1(%arg0: i32, %arg1: i32) -> (i32, i32) {
    %c0_i32 = arith.constant 0 : i32
    %c0_i32_0 = arith.constant 0 : i32
    return %c0_i32, %arg1 : i32, i32
  }
  func.func @transform_2(%arg0: i32, %arg1: i32) -> (i32, i32) {
    %c0_i32 = arith.constant 0 : i32
    %c0_i32_0 = arith.constant 0 : i32
    return %c0_i32, %arg1 : i32, i32
  }
  func.func @transform_3(%arg0: i32, %arg1: i32) -> (i32, i32) {
    %c0_i32 = arith.constant 0 : i32
    return %arg0, %arg1 : i32, i32
  }
}

</mosaic_0001>

<llo_original>
// kernel: tpu_custom_call.1
$region0: #{tpu_custom_call.1}
  #allocation0 [shape = 'u32[]', space=smem, size = 0x4, offset = 0x4, fixed_abs, tag = 'smem constant byte address 0x4 - core index']
  #allocation1 [shape = 'u32[72,128]{1,0:T(1,128)}', space=vmem, size = 0x9000, scoped, tag = 'internal scratch']
  %s0 = inlined_call_operand.hbm [shape: bf16[128,128], index: 0, kind: input, shape index: {}]
  %s1 = inlined_call_operand.hbm [shape: bf16[128,512], index: 1, kind: input, shape index: {}]
  %s2 = inlined_call_operand.hbm [shape: f32[1,512], index: 2, kind: input, shape index: {}]
  %s3 = inlined_call_operand.hbm [shape: bf16[128,512], index: 3, kind: output, shape index: {}]
  %s4 = sld [smem:[#allocation0]]
  $region34: #{tpu_custom_call.1} parent=0
    _
  %s6 = ssub.s32 1, %s4
  %s7 = scalar_select 0, %s6, %s4
  $region1: #{tpu_custom_call.1} parent=0
    #allocation2 [shape = 'u8[32768]{0}', space=vmem, size = 0x8000, scoped, tag = 'input window, operand 0, single buffered']
    #allocation3 [shape = 's32[1]{0}', space=sflag, size = 0x4, scoped, tag = 'scoped memory for tpu_custom_call.1']
    #allocation4 [shape = 's32[1]{0}', space=sflag, size = 0x4, scoped, tag = 'scoped memory for tpu_custom_call.1']
    #allocation5 [shape = 'u8[131072]{0}', space=vmem, size = 0x20000, scoped, tag = 'input window, operand 1, single buffered']
    #allocation6 [shape = 's32[1]{0}', space=sflag, size = 0x4, scoped, tag = 'scoped memory for tpu_custom_call.1']
    #allocation7 [shape = 'u8[2048]{0}', space=vmem, size = 0x800, scoped, tag = 'input window, operand 2, single buffered']
    #allocation8 [shape = 'u8[131072]{0}', space=vmem, size = 0x20000, scoped, tag = 'output window, operand 0, single buffered']
    %8 = vsyncpa [#allocation3], 0
    %9 = vsyncpa [#allocation6], 0
    %10 = vsyncpa [#allocation4], 0
    // Predicated region
    $region2: #{tpu_custom_call.1} parent=1 // pred_check
      _
    $region3: #{tpu_custom_call.1} parent=1 // pred_check_branch
      %12 = sbr.rel (0) target = $region5
    $region4: #{tpu_custom_call.1} parent=1 // pred_region
      %14 = vsyncadd [#allocation3], 0
      %s15 = sshll.u32 %s0, 4
      %s16 = int_to_ptr.hbm [resolvable:$true] %s15
      %s17 = sshll.u32 [#allocation2], 4
      %s18 = int_to_ptr.vmem [resolvable:$true] %s17
      %23 = dma.hbm_to_vmem [thread:$0]  %s16, 1024, %s18, [#allocation3], 64, 64, 4
    $region5: #{tpu_custom_call.1} parent=1 // pred_fallthru
      _
    // Predicated region
    $region6: #{tpu_custom_call.1} parent=1 // pred_check
      _
    $region7: #{tpu_custom_call.1} parent=1 // pred_check_branch
      %25 = sbr.rel (0) target = $region9
    $region8: #{tpu_custom_call.1} parent=1 // pred_region
      %27 = vsyncadd [#allocation6], 0
      %s28 = sshll.u32 %s1, 4
      %s29 = int_to_ptr.hbm [resolvable:$true] %s28
      %s30 = sshll.u32 [#allocation5], 4
      %s31 = int_to_ptr.vmem [resolvable:$true] %s30
      %36 = dma.hbm_to_vmem [thread:$0]  %s29, 4096, %s31, [#allocation6], 256, 256, 16
    $region9: #{tpu_custom_call.1} parent=1 // pred_fallthru
      _
    // Predicated region
    $region10: #{tpu_custom_call.1} parent=1 // pred_check
      _
    $region11: #{tpu_custom_call.1} parent=1 // pred_check_branch
      %38 = sbr.rel (0) target = $region13
    $region12: #{tpu_custom_call.1} parent=1 // pred_region
      %40 = vsyncadd [#allocation6], 0
      %s42 = sshll.u32 %s2, 4
      %s43 = int_to_ptr.hbm [resolvable:$true] %s42
      %s44 = sshll.u32 [#allocation7], 4
      %s45 = int_to_ptr.vmem [resolvable:$true] %s44
      %47 = dma.hbm_to_vmem [thread:$0]  %s43, 64, %s45, [#allocation6]
    $region13: #{tpu_custom_call.1} parent=1 // pred_fallthru
      _
    // Predicated region
    $region14: #{tpu_custom_call.1} parent=1 // pred_check
      _
    $region15: #{tpu_custom_call.1} parent=1 // pred_check_branch
      %49 = sbr.rel (0) target = $region17
    $region16: #{tpu_custom_call.1} parent=1 // pred_region
      %51 = dma.done [#allocation3], 1024
    $region17: #{tpu_custom_call.1} parent=1 // pred_fallthru
      _
    // Predicated region
    $region18: #{tpu_custom_call.1} parent=1 // pred_check
      _
    $region19: #{tpu_custom_call.1} parent=1 // pred_check_branch
      %53 = sbr.rel (0) target = $region21
    $region20: #{tpu_custom_call.1} parent=1 // pred_region
      %55 = dma.done [#allocation6], 4096
    $region21: #{tpu_custom_call.1} parent=1 // pred_fallthru
      _
    // Predicated region
    $region22: #{tpu_custom_call.1} parent=1 // pred_check
      _
    $region23: #{tpu_custom_call.1} parent=1 // pred_check_branch
      %57 = sbr.rel (0) target = $region25
    $region24: #{tpu_custom_call.1} parent=1 // pred_region
      %59 = dma.done [#allocation6], 64
    $region25: #{tpu_custom_call.1} parent=1 // pred_fallthru
      _
    %v60 = vld [vmem:[#allocation2] sm:$0xf]
    %v61 = vld [vmem:[#allocation2 + $0x4] sm:$0xf]
    %v62 = vld [vmem:[#allocation2 + $0x8] sm:$0xf]
    %v63 = vld [vmem:[#allocation2 + $0xc] sm:$0xf]
    %v64 = vld [vmem:[#allocation2 + $0x10] sm:$0xf]
    %v65 = vld [vmem:[#allocation2 + $0x14] sm:$0xf]
    %v66 = vld [vmem:[#allocation2 + $0x18] sm:$0xf]
    %v67 = vld [vmem:[#allocation2 + $0x1c] sm:$0xf]
    %v68 = vld [vmem:[#allocation2 + $0x20] sm:$0xf]
    %v69 = vld [vmem:[#allocation2 + $0x24] sm:$0xf]
    %v70 = vld [vmem:[#allocation2 + $0x28] sm:$0xf]
    %v71 = vld [vmem:[#allocation2 + $0x2c] sm:$0xf]
    %v72 = vld [vmem:[#allocation2 + $0x30] sm:$0xf]
    %v73 = vld [vmem:[#allocation2 + $0x34] sm:$0xf]
    %v74 = vld [vmem:[#allocation2 + $0x38] sm:$0xf]
    %v75 = vld [vmem:[#allocation2 + $0x3c] sm:$0xf]
    %v76 = vld [vmem:[#allocation5] sm:$0xff]
    %v77 = vld [vmem:[#allocation5 + $0x8] sm:$0xff]
    %v78 = vld [vmem:[#allocation5 + $0x10] sm:$0xff]
    %v79 = vld [vmem:[#allocation5 + $0x18] sm:$0xff]
    %v80 = vld [vmem:[#allocation5 + $0x20] sm:$0xff]
    %v81 = vld [vmem:[#allocation5 + $0x28] sm:$0xff]
    %v82 = vld [vmem:[#allocation5 + $0x30] sm:$0xff]
    %v83 = vld [vmem:[#allocation5 + $0x38] sm:$0xff]
    %v84 = vld [vmem:[#allocation5 + $0x40] sm:$0xff]
    %v85 = vld [vmem:[#allocation5 + $0x48] sm:$0xff]
    %v86 = vld [vmem:[#allocation5 + $0x50] sm:$0xff]
    %v87 = vld [vmem:[#allocation5 + $0x58] sm:$0xff]
    %v88 = vld [vmem:[#allocation5 + $0x60] sm:$0xff]
    %v89 = vld [vmem:[#allocation5 + $0x68] sm:$0xff]
    %v90 = vld [vmem:[#allocation5 + $0x70] sm:$0xff]
    %v91 = vld [vmem:[#allocation5 + $0x78] sm:$0xff]
    %v92 = vld [vmem:[#allocation5 + $0x80] sm:$0xff]
    %v93 = vld [vmem:[#allocation5 + $0x88] sm:$0xff]
    %v94 = vld [vmem:[#allocation5 + $0x90] sm:$0xff]
    %v95 = vld [vmem:[#allocation5 + $0x98] sm:$0xff]
    %v96 = vld [vmem:[#allocation5 + $0xa0] sm:$0xff]
    %v97 = vld [vmem:[#allocation5 + $0xa8] sm:$0xff]
    %v98 = vld [vmem:[#allocation5 + $0xb0] sm:$0xff]
    %v99 = vld [vmem:[#allocation5 + $0xb8] sm:$0xff]
    %v100 = vld [vmem:[#allocation5 + $0xc0] sm:$0xff]
    %v101 = vld [vmem:[#allocation5 + $0xc8] sm:$0xff]
    %v102 = vld [vmem:[#allocation5 + $0xd0] sm:$0xff]
    %v103 = vld [vmem:[#allocation5 + $0xd8] sm:$0xff]
    %v104 = vld [vmem:[#allocation5 + $0xe0] sm:$0xff]
    %v105 = vld [vmem:[#allocation5 + $0xe8] sm:$0xff]
    %v106 = vld [vmem:[#allocation5 + $0xf0] sm:$0xff]
    %v107 = vld [vmem:[#allocation5 + $0xf8] sm:$0xff]
    %v108 = vld [vmem:[#allocation7] sm:$0xf]
    %v110 = vperm.slane %v108, 0
    %v111 = vperm.slane %v108, 1
    %v112 = vperm.slane %v108, 2
    %v113 = vperm.slane %v108, 3
    %v134 = vunpack.c.l.b16 %v60
    %v135 = vunpack.c.l.b16 %v61
    %v136 = vunpack.c.l.b16 %v62
    %v137 = vunpack.c.l.b16 %v63
    %v138 = vunpack.c.l.b16 %v64
    %v139 = vunpack.c.l.b16 %v65
    %v140 = vunpack.c.l.b16 %v66
    %v141 = vunpack.c.l.b16 %v67
    %v142 = vunpack.c.l.b16 %v68
    %v143 = vunpack.c.l.b16 %v69
    %v144 = vunpack.c.l.b16 %v70
    %v145 = vunpack.c.l.b16 %v71
    %v146 = vunpack.c.l.b16 %v72
    %v147 = vunpack.c.l.b16 %v73
    %v148 = vunpack.c.l.b16 %v74
    %v149 = vunpack.c.l.b16 %v75
    %v150 = vpack.c.b16 %v135, %v134
    %v151 = vpack.c.b16 %v137, %v136
    %v152 = vpack.c.b16 %v139, %v138
    %v153 = vpack.c.b16 %v141, %v140
    %v154 = vpack.c.b16 %v143, %v142
    %v155 = vpack.c.b16 %v145, %v144
    %v156 = vpack.c.b16 %v147, %v146
    %v157 = vpack.c.b16 %v149, %v148
    %v198 = vunpack.c.l.b16 %v76
    %v199 = vunpack.c.h.b16 %v76
    %v200 = vunpack.c.l.b16 %v77
    %v201 = vunpack.c.h.b16 %v77
    %v202 = vunpack.c.l.b16 %v78
    %v203 = vunpack.c.h.b16 %v78
    %v204 = vunpack.c.l.b16 %v79
    %v205 = vunpack.c.h.b16 %v79
    %v206 = vunpack.c.l.b16 %v80
    %v207 = vunpack.c.h.b16 %v80
    %v208 = vunpack.c.l.b16 %v81
    %v209 = vunpack.c.h.b16 %v81
    %v210 = vunpack.c.l.b16 %v82
    %v211 = vunpack.c.h.b16 %v82
    %v212 = vunpack.c.l.b16 %v83
    %v213 = vunpack.c.h.b16 %v83
    %v214 = vunpack.c.l.b16 %v84
    %v215 = vunpack.c.h.b16 %v84
    %v216 = vunpack.c.l.b16 %v85
    %v217 = vunpack.c.h.b16 %v85
    %v218 = vunpack.c.l.b16 %v86
    %v219 = vunpack.c.h.b16 %v86
    %v220 = vunpack.c.l.b16 %v87
    %v221 = vunpack.c.h.b16 %v87
    %v222 = vunpack.c.l.b16 %v88
    %v223 = vunpack.c.h.b16 %v88
    %v224 = vunpack.c.l.b16 %v89
    %v225 = vunpack.c.h.b16 %v89
    %v226 = vunpack.c.l.b16 %v90
    %v227 = vunpack.c.h.b16 %v90
    %v228 = vunpack.c.l.b16 %v91
    %v229 = vunpack.c.h.b16 %v91
    %v230 = vunpack.c.l.b16 %v92
    %v231 = vunpack.c.h.b16 %v92
    %v232 = vunpack.c.l.b16 %v93
    %v233 = vunpack.c.h.b16 %v93
    %v234 = vunpack.c.l.b16 %v94
    %v235 = vunpack.c.h.b16 %v94
    %v236 = vunpack.c.l.b16 %v95
    %v237 = vunpack.c.h.b16 %v95
    %v238 = vunpack.c.l.b16 %v96
    %v239 = vunpack.c.h.b16 %v96
    %v240 = vunpack.c.l.b16 %v97
    %v241 = vunpack.c.h.b16 %v97
    %v242 = vunpack.c.l.b16 %v98
    %v243 = vunpack.c.h.b16 %v98
    %v244 = vunpack.c.l.b16 %v99
    %v245 = vunpack.c.h.b16 %v99
    %v246 = vunpack.c.l.b16 %v100
    %v247 = vunpack.c.h.b16 %v100
    %v248 = vunpack.c.l.b16 %v101
    %v249 = vunpack.c.h.b16 %v101
    %v250 = vunpack.c.l.b16 %v102
    %v251 = vunpack.c.h.b16 %v102
    %v252 = vunpack.c.l.b16 %v103
    %v253 = vunpack.c.h.b16 %v103
    %v254 = vunpack.c.l.b16 %v104
    %v255 = vunpack.c.h.b16 %v104
    %v256 = vunpack.c.l.b16 %v105
    %v257 = vunpack.c.h.b16 %v105
    %v258 = vunpack.c.l.b16 %v106
    %v259 = vunpack.c.h.b16 %v106
    %v260 = vunpack.c.l.b16 %v107
    %v261 = vunpack.c.h.b16 %v107
    %v262 = vpack.c.b16 %v202, %v198
    %v263 = vpack.c.b16 %v203, %v199
    %v264 = vpack.c.b16 %v204, %v200
    %v265 = vpack.c.b16 %v205, %v201
    %v266 = vpack.c.b16 %v210, %v206
    %v267 = vpack.c.b16 %v211, %v207
    %v268 = vpack.c.b16 %v212, %v208
    %v269 = vpack.c.b16 %v213, %v209
    %v270 = vpack.c.b16 %v218, %v214
    %v271 = vpack.c.b16 %v219, %v215
    %v272 = vpack.c.b16 %v220, %v216
    %v273 = vpack.c.b16 %v221, %v217
    %v274 = vpack.c.b16 %v226, %v222
    %v275 = vpack.c.b16 %v227, %v223
    %v276 = vpack.c.b16 %v228, %v224
    %v277 = vpack.c.b16 %v229, %v225
    %v278 = vpack.c.b16 %v234, %v230
    %v279 = vpack.c.b16 %v235, %v231
    %v280 = vpack.c.b16 %v236, %v232
    %v281 = vpack.c.b16 %v237, %v233
    %v282 = vpack.c.b16 %v242, %v238
    %v283 = vpack.c.b16 %v243, %v239
    %v284 = vpack.c.b16 %v244, %v240
    %v285 = vpack.c.b16 %v245, %v241
    %v286 = vpack.c.b16 %v250, %v246
    %v287 = vpack.c.b16 %v251, %v247
    %v288 = vpack.c.b16 %v252, %v248
    %v289 = vpack.c.b16 %v253, %v249
    %v290 = vpack.c.b16 %v258, %v254
    %v291 = vpack.c.b16 %v259, %v255
    %v292 = vpack.c.b16 %v260, %v256
    %v293 = vpack.c.b16 %v261, %v257
    %326 = vmatpush.bf16.msra.mxu0 %v290
    %327 = vmatpush.bf16.msra.mxu0 %v286
    %328 = vmatpush.bf16.msra.mxu0 %v282
    %329 = vmatpush.bf16.msra.mxu0 %v278
    %330 = vmatpush.bf16.msra.mxu0 %v274
    %331 = vmatpush.bf16.msra.mxu0 %v270
    %332 = vmatpush.bf16.msra.mxu0 %v266
    %333 = vmatpush.bf16.msra.mxu0 %v262
    %334 = vmatmul.bf16.gmra.mxu0 %v150
    %v335 = vpop.f32.mrf.mxu0
    %v336 = vadd.f32 %v110, %v335
    %v337 = vpop.f32.mrf.mxu0
    %v338 = vadd.f32 %v110, %v337
    %339 = vmatmul.bf16.gmra.mxu0 %v151
    %v340 = vpop.f32.mrf.mxu0
    %v341 = vadd.f32 %v110, %v340
    %v342 = vpop.f32.mrf.mxu0
    %v343 = vadd.f32 %v110, %v342
    %344 = vmatmul.bf16.gmra.mxu0 %v152
    %v345 = vpop.f32.mrf.mxu0
    %v346 = vadd.f32 %v110, %v345
    %v347 = vpop.f32.mrf.mxu0
    %v348 = vadd.f32 %v110, %v347
    %349 = vmatmul.bf16.gmra.mxu0 %v153
    %v350 = vpop.f32.mrf.mxu0
    %v351 = vadd.f32 %v110, %v350
    %v352 = vpop.f32.mrf.mxu0
    %v353 = vadd.f32 %v110, %v352
    %354 = vmatmul.bf16.gmra.mxu0 %v154
    %v355 = vpop.f32.mrf.mxu0
    %v356 = vadd.f32 %v110, %v355
    %v357 = vpop.f32.mrf.mxu0
    %v358 = vadd.f32 %v110, %v357
    %359 = vmatmul.bf16.gmra.mxu0 %v155
    %v360 = vpop.f32.mrf.mxu0
    %v361 = vadd.f32 %v110, %v360
    %v362 = vpop.f32.mrf.mxu0
    %v363 = vadd.f32 %v110, %v362
    %364 = vmatmul.bf16.gmra.mxu0 %v156
    %v365 = vpop.f32.mrf.mxu0
    %v366 = vadd.f32 %v110, %v365
    %v367 = vpop.f32.mrf.mxu0
    %v368 = vadd.f32 %v110, %v367
    %369 = vmatmul.bf16.gmra.mxu0 %v157
    %v370 = vpop.f32.mrf.mxu0
    %v371 = vadd.f32 %v110, %v370
    %v372 = vpop.f32.mrf.mxu0
    %v373 = vadd.f32 %v110, %v372
    %374 = vdwg.mxu0
    %375 = vmatpush.bf16.msra.mxu0 %v291
    %376 = vmatpush.bf16.msra.mxu0 %v287
    %377 = vmatpush.bf16.msra.mxu0 %v283
    %378 = vmatpush.bf16.msra.mxu0 %v279
    %379 = vmatpush.bf16.msra.mxu0 %v275
    %380 = vmatpush.bf16.msra.mxu0 %v271
    %381 = vmatpush.bf16.msra.mxu0 %v267
    %382 = vmatpush.bf16.msra.mxu0 %v263
    %383 = vmatmul.bf16.gmra.mxu0 %v150
    %v384 = vpop.f32.mrf.mxu0
    %v385 = vadd.f32 %v111, %v384
    %v386 = vpop.f32.mrf.mxu0
    %v387 = vadd.f32 %v111, %v386
    %388 = vmatmul.bf16.gmra.mxu0 %v151
    %v389 = vpop.f32.mrf.mxu0
    %v390 = vadd.f32 %v111, %v389
    %v391 = vpop.f32.mrf.mxu0
    %v392 = vadd.f32 %v111, %v391
    %393 = vmatmul.bf16.gmra.mxu0 %v152
    %v394 = vpop.f32.mrf.mxu0
    %v395 = vadd.f32 %v111, %v394
    %v396 = vpop.f32.mrf.mxu0
    %v397 = vadd.f32 %v111, %v396
    %398 = vmatmul.bf16.gmra.mxu0 %v153
    %v399 = vpop.f32.mrf.mxu0
    %v400 = vadd.f32 %v111, %v399
    %v401 = vpop.f32.mrf.mxu0
    %v402 = vadd.f32 %v111, %v401
    %403 = vmatmul.bf16.gmra.mxu0 %v154
    %v404 = vpop.f32.mrf.mxu0
    %v405 = vadd.f32 %v111, %v404
    %v406 = vpop.f32.mrf.mxu0
    %v407 = vadd.f32 %v111, %v406
    %408 = vmatmul.bf16.gmra.mxu0 %v155
    %v409 = vpop.f32.mrf.mxu0
    %v410 = vadd.f32 %v111, %v409
    %v411 = vpop.f32.mrf.mxu0
    %v412 = vadd.f32 %v111, %v411
    %413 = vmatmul.bf16.gmra.mxu0 %v156
    %v414 = vpop.f32.mrf.mxu0
    %v415 = vadd.f32 %v111, %v414
    %v416 = vpop.f32.mrf.mxu0
    %v417 = vadd.f32 %v111, %v416
    %418 = vmatmul.bf16.gmra.mxu0 %v157
    %v419 = vpop.f32.mrf.mxu0
    %v420 = vadd.f32 %v111, %v419
    %v421 = vpop.f32.mrf.mxu0
    %v422 = vadd.f32 %v111, %v421
    %423 = vdwg.mxu0
    %424 = vmatpush.bf16.msra.mxu0 %v292
    %425 = vmatpush.bf16.msra.mxu0 %v288
    %426 = vmatpush.bf16.msra.mxu0 %v284
    %427 = vmatpush.bf16.msra.mxu0 %v280
    %428 = vmatpush.bf16.msra.mxu0 %v276
    %429 = vmatpush.bf16.msra.mxu0 %v272
    %430 = vmatpush.bf16.msra.mxu0 %v268
    %431 = vmatpush.bf16.msra.mxu0 %v264
    %432 = vmatmul.bf16.gmra.mxu0 %v150
    %v433 = vpop.f32.mrf.mxu0
    %v434 = vadd.f32 %v112, %v433
    %v435 = vpop.f32.mrf.mxu0
    %v436 = vadd.f32 %v112, %v435
    %437 = vmatmul.bf16.gmra.mxu0 %v151
    %v438 = vpop.f32.mrf.mxu0
    %v439 = vadd.f32 %v112, %v438
    %v440 = vpop.f32.mrf.mxu0
    %v441 = vadd.f32 %v112, %v440
    %442 = vmatmul.bf16.gmra.mxu0 %v152
    %v443 = vpop.f32.mrf.mxu0
    %v444 = vadd.f32 %v112, %v443
    %v445 = vpop.f32.mrf.mxu0
    %v446 = vadd.f32 %v112, %v445
    %447 = vmatmul.bf16.gmra.mxu0 %v153
    %v448 = vpop.f32.mrf.mxu0
    %v449 = vadd.f32 %v112, %v448
    %v450 = vpop.f32.mrf.mxu0
    %v451 = vadd.f32 %v112, %v450
    %452 = vmatmul.bf16.gmra.mxu0 %v154
    %v453 = vpop.f32.mrf.mxu0
    %v454 = vadd.f32 %v112, %v453
    %v455 = vpop.f32.mrf.mxu0
    %v456 = vadd.f32 %v112, %v455
    %457 = vmatmul.bf16.gmra.mxu0 %v155
    %v458 = vpop.f32.mrf.mxu0
    %v459 = vadd.f32 %v112, %v458
    %v460 = vpop.f32.mrf.mxu0
    %v461 = vadd.f32 %v112, %v460
    %462 = vmatmul.bf16.gmra.mxu0 %v156
    %v463 = vpop.f32.mrf.mxu0
    %v464 = vadd.f32 %v112, %v463
    %v465 = vpop.f32.mrf.mxu0
    %v466 = vadd.f32 %v112, %v465
    %467 = vmatmul.bf16.gmra.mxu0 %v157
    %v468 = vpop.f32.mrf.mxu0
    %v469 = vadd.f32 %v112, %v468
    %v470 = vpop.f32.mrf.mxu0
    %v471 = vadd.f32 %v112, %v470
    %472 = vdwg.mxu0
    %473 = vmatpush.bf16.msra.mxu0 %v293
    %474 = vmatpush.bf16.msra.mxu0 %v289
    %475 = vmatpush.bf16.msra.mxu0 %v285
    %476 = vmatpush.bf16.msra.mxu0 %v281
    %477 = vmatpush.bf16.msra.mxu0 %v277
    %478 = vmatpush.bf16.msra.mxu0 %v273
    %479 = vmatpush.bf16.msra.mxu0 %v269
    %480 = vmatpush.bf16.msra.mxu0 %v265
    %481 = vmatmul.bf16.gmra.mxu0 %v150
    %v482 = vpop.f32.mrf.mxu0
    %v483 = vadd.f32 %v113, %v482
    %v484 = vpop.f32.mrf.mxu0
    %v485 = vadd.f32 %v113, %v484
    %486 = vmatmul.bf16.gmra.mxu0 %v151
    %v487 = vpop.f32.mrf.mxu0
    %v488 = vadd.f32 %v113, %v487
    %v489 = vpop.f32.mrf.mxu0
    %v490 = vadd.f32 %v113, %v489
    %491 = vmatmul.bf16.gmra.mxu0 %v152
    %v492 = vpop.f32.mrf.mxu0
    %v493 = vadd.f32 %v113, %v492
    %v494 = vpop.f32.mrf.mxu0
    %v495 = vadd.f32 %v113, %v494
    %496 = vmatmul.bf16.gmra.mxu0 %v153
    %v497 = vpop.f32.mrf.mxu0
    %v498 = vadd.f32 %v113, %v497
    %v499 = vpop.f32.mrf.mxu0
    %v500 = vadd.f32 %v113, %v499
    %501 = vmatmul.bf16.gmra.mxu0 %v154
    %v502 = vpop.f32.mrf.mxu0
    %v503 = vadd.f32 %v113, %v502
    %v504 = vpop.f32.mrf.mxu0
    %v505 = vadd.f32 %v113, %v504
    %506 = vmatmul.bf16.gmra.mxu0 %v155
    %v507 = vpop.f32.mrf.mxu0
    %v508 = vadd.f32 %v113, %v507
    %v509 = vpop.f32.mrf.mxu0
    %v510 = vadd.f32 %v113, %v509
    %511 = vmatmul.bf16.gmra.mxu0 %v156
    %v512 = vpop.f32.mrf.mxu0
    %v513 = vadd.f32 %v113, %v512
    %v514 = vpop.f32.mrf.mxu0
    %v515 = vadd.f32 %v113, %v514
    %516 = vmatmul.bf16.gmra.mxu0 %v157
    %v517 = vpop.f32.mrf.mxu0
    %v518 = vadd.f32 %v113, %v517
    %v519 = vpop.f32.mrf.mxu0
    %v520 = vadd.f32 %v113, %v519
    %521 = vdwg.mxu0
    %v522 = vpack.c.bf16 %v385, %v336
    %v523 = vpack.c.bf16 %v483, %v434
    %v524 = vpack.c.bf16 %v387, %v338
    %v525 = vpack.c.bf16 %v485, %v436
    %v526 = vpack.c.bf16 %v390, %v341
    %v527 = vpack.c.bf16 %v488, %v439
    %v528 = vpack.c.bf16 %v392, %v343
    %v529 = vpack.c.bf16 %v490, %v441
    %v530 = vpack.c.bf16 %v395, %v346
    %v531 = vpack.c.bf16 %v493, %v444
    %v532 = vpack.c.bf16 %v397, %v348
    %v533 = vpack.c.bf16 %v495, %v446
    %v534 = vpack.c.bf16 %v400, %v351
    %v535 = vpack.c.bf16 %v498, %v449
    %v536 = vpack.c.bf16 %v402, %v353
    %v537 = vpack.c.bf16 %v500, %v451
    %v538 = vpack.c.bf16 %v405, %v356
    %v539 = vpack.c.bf16 %v503, %v454
    %v540 = vpack.c.bf16 %v407, %v358
    %v541 = vpack.c.bf16 %v505, %v456
    %v542 = vpack.c.bf16 %v410, %v361
    %v543 = vpack.c.bf16 %v508, %v459
    %v544 = vpack.c.bf16 %v412, %v363
    %v545 = vpack.c.bf16 %v510, %v461
    %v546 = vpack.c.bf16 %v415, %v366
    %v547 = vpack.c.bf16 %v513, %v464
    %v548 = vpack.c.bf16 %v417, %v368
    %v549 = vpack.c.bf16 %v515, %v466
    %v550 = vpack.c.bf16 %v420, %v371
    %v551 = vpack.c.bf16 %v518, %v469
    %v552 = vpack.c.bf16 %v422, %v373
    %v553 = vpack.c.bf16 %v520, %v471
    %554 = vst [vmem:[#allocation8] sm:$0xff] %v522
    %555 = vst [vmem:[#allocation8 + $0x8] sm:$0xff] %v523
    %556 = vst [vmem:[#allocation8 + $0x10] sm:$0xff] %v524
    %557 = vst [vmem:[#allocation8 + $0x18] sm:$0xff] %v525
    %558 = vst [vmem:[#allocation8 + $0x20] sm:$0xff] %v526
    %559 = vst [vmem:[#allocation8 + $0x28] sm:$0xff] %v527
    %560 = vst [vmem:[#allocation8 + $0x30] sm:$0xff] %v528
    %561 = vst [vmem:[#allocation8 + $0x38] sm:$0xff] %v529
    %562 = vst [vmem:[#allocation8 + $0x40] sm:$0xff] %v530
    %563 = vst [vmem:[#allocation8 + $0x48] sm:$0xff] %v531
    %564 = vst [vmem:[#allocation8 + $0x50] sm:$0xff] %v532
    %565 = vst [vmem:[#allocation8 + $0x58] sm:$0xff] %v533
    %566 = vst [vmem:[#allocation8 + $0x60] sm:$0xff] %v534
    %567 = vst [vmem:[#allocation8 + $0x68] sm:$0xff] %v535
    %568 = vst [vmem:[#allocation8 + $0x70] sm:$0xff] %v536
    %569 = vst [vmem:[#allocation8 + $0x78] sm:$0xff] %v537
    %570 = vst [vmem:[#allocation8 + $0x80] sm:$0xff] %v538
    %571 = vst [vmem:[#allocation8 + $0x88] sm:$0xff] %v539
    %572 = vst [vmem:[#allocation8 + $0x90] sm:$0xff] %v540
    %573 = vst [vmem:[#allocation8 + $0x98] sm:$0xff] %v541
    %574 = vst [vmem:[#allocation8 + $0xa0] sm:$0xff] %v542
    %575 = vst [vmem:[#allocation8 + $0xa8] sm:$0xff] %v543
    %576 = vst [vmem:[#allocation8 + $0xb0] sm:$0xff] %v544
    %577 = vst [vmem:[#allocation8 + $0xb8] sm:$0xff] %v545
    %578 = vst [vmem:[#allocation8 + $0xc0] sm:$0xff] %v546
    %579 = vst [vmem:[#allocation8 + $0xc8] sm:$0xff] %v547
    %580 = vst [vmem:[#allocation8 + $0xd0] sm:$0xff] %v548
    %581 = vst [vmem:[#allocation8 + $0xd8] sm:$0xff] %v549
    %582 = vst [vmem:[#allocation8 + $0xe0] sm:$0xff] %v550
    %583 = vst [vmem:[#allocation8 + $0xe8] sm:$0xff] %v551
    %584 = vst [vmem:[#allocation8 + $0xf0] sm:$0xff] %v552
    %585 = vst [vmem:[#allocation8 + $0xf8] sm:$0xff] %v553
    // Predicated region
    $region26: #{tpu_custom_call.1} parent=1 // pred_check
      _
    $region27: #{tpu_custom_call.1} parent=1 // pred_check_branch
      %587 = sbr.rel (0) target = $region29
    $region28: #{tpu_custom_call.1} parent=1 // pred_region
      %589 = vsyncadd [#allocation4], 0
      %s590 = sshll.u32 [#allocation8], 4
      %s591 = int_to_ptr.vmem [resolvable:$true] %s590
      %s592 = sshll.u32 %s3, 4
      %s593 = int_to_ptr.hbm [resolvable:$true] %s592
      %598 = dma.vmem_to_hbm [thread:$0]  %s591, 4096, %s593, [#allocation4], 256, 256, 16
    $region29: #{tpu_custom_call.1} parent=1 // pred_fallthru
      _
    // Predicated region
    $region30: #{tpu_custom_call.1} parent=1 // pred_check
      _
    $region31: #{tpu_custom_call.1} parent=1 // pred_check_branch
      %600 = sbr.rel (0) target = $region33
    $region32: #{tpu_custom_call.1} parent=1 // pred_region
      %602 = dma.done [#allocation4], 4096
    $region33: #{tpu_custom_call.1} parent=1 // pred_fallthru
      _
    %603 = vsyncpa [#allocation3], 1
    %604 = vsyncpa [#allocation6], 1
    %605 = vsyncpa [#allocation4], 1

</llo_original>
